<compile_context>
chip_gen: v7x
topology: tpu7x:2x2x1
jax: 0.10.0
libtpu: 0.0.40
codegen_flags: <defaults>
</compile_context>

<pallas_src>
import functools

import jax
import jax.numpy as jnp
from jax.experimental import pallas as pl
from jax.experimental.pallas import tpu as pltpu

_LANES = 128
_PAD_NEG = -1e30  # sigmoid(_PAD_NEG) == 0.0 in f32 -> padding adds nothing


def _search_loss_kernel(w_ref, pt_ref, zeta_ref, out_ref, *, groups, n_base):
    """w_ref: SMEM (4,) f32 = [w1_enc, w2_enc, w1_dec, w2_dec]
    pt_ref: VMEM (2, B, F) f32  (row 0 = pred, row 1 = target)
    zeta_ref: VMEM (R, 128) f32 lane-dense packed gate-logit slab
    out_ref: VMEM (1, 128) f32 packed result row
    groups: tuple of (row_offset, num_rows, numel) per gate group (static)
    """
    # ---- base loss: surrogate actor objective (mean squared error) ----------
    # TODO(synk): the real `actor(inputs)` is an external tracking network +
    # criterion; it is replaced by a deterministic MSE surrogate so that the
    # loss-combination semantics of `searchloss` stay exact.
    diff = pt_ref[0].astype(jnp.float32) - pt_ref[1].astype(jnp.float32)
    base = jnp.sum(diff * diff, keepdims=True) * (1.0 / n_base)          # (1,1)

    # ---- sparsity losses: mean(sigmoid(zeta)) per (used) gate group ---------
    sig = jax.nn.sigmoid(zeta_ref[...].astype(jnp.float32))              # (R,128)

    def group_mean(g):
        off, nrows, numel = groups[g]
        s = jnp.sum(sig[off:off + nrows, :], keepdims=True)              # (1,1)
        return s * (1.0 / numel)

    sa_enc = group_mean(0)
    sm_enc = group_mean(1)
    sa_dec = group_mean(2)
    sm_dec = group_mean(3)

    # ---- weighted total (weights read from SMEM -> no recompile on change) --
    w1e = w_ref[0]
    w2e = w_ref[1]
    w1d = w_ref[2]
    w2d = w_ref[3]
    total = base + w1e * sa_enc + w2e * sm_enc + w1d * sa_dec + w2d * sm_dec

    # ---- single lane-dense packed output row (one unmasked vector store) ----
    lane = jax.lax.broadcasted_iota(jnp.int32, out_ref.shape, 1)          # (1,128)
    row = jnp.zeros(out_ref.shape, jnp.float32)
    row = jnp.where(lane == 0, total, row)
    row = jnp.where(lane == 1, base, row)
    row = jnp.where(lane == 2, sa_enc, row)
    row = jnp.where(lane == 3, sm_enc, row)
    row = jnp.where(lane == 4, sa_dec, row)
    row = jnp.where(lane == 5, sm_dec, row)
    out_ref[...] = row


def _pack_gate_groups(gates):
    """Flatten every gate group, pad each to whole 128-lane rows, stack into
    one lane-dense f32 slab (rows padded to a multiple of 8 = one f32 vreg).
    Returns (slab, ((row_off, num_rows, numel), ...)) with static metadata."""
    rows, groups, row_off = [], [], 0
    for z in gates:
        flat = jnp.asarray(z, jnp.float32).reshape(-1)
        numel = int(flat.shape[0])
        nrows = max(1, -(-numel // _LANES))
        padded = jnp.pad(flat, (0, nrows * _LANES - numel),
                         constant_values=_PAD_NEG)
        rows.append(padded.reshape(nrows, _LANES))
        groups.append((row_off, nrows, float(numel)))
        row_off += nrows
    pad_rows = (-row_off) % 8
    if pad_rows:
        rows.append(jnp.full((pad_rows, _LANES), _PAD_NEG, jnp.float32))
    slab = jnp.concatenate(rows, axis=0)
    return slab, tuple(groups)


def search_loss(pred, target,
                zeta_attn_enc, zeta_mlp_enc, zeta_patch_enc,
                zeta_attn_dec, zeta_mlp_dec, zeta_patch_dec,
                *, w1_enc, w2_enc, w1_dec, w2_dec):
    """Returns one packed (6,) f32 array:
       [total, base, sp_attn_enc, sp_mlp_enc, sp_attn_dec, sp_mlp_dec].

    zeta_patch_enc / zeta_patch_dec mirror get_sparsity_loss's gate groups but
    their losses are dead in the original module (not summed, not returned), so
    they never enter the kernel (saves two input DMAs)."""
    del zeta_patch_enc, zeta_patch_dec  # dead in the original forward pass

    # One (2, B, F) input instead of separate pred/target DMAs.
    pred2 = jnp.asarray(pred, jnp.float32).reshape(pred.shape[0], -1)
    tgt2 = jnp.asarray(target, jnp.float32).reshape(target.shape[0], -1)
    pt = jnp.stack([pred2, tgt2], axis=0)                       # (2, B, F)
    n_base = float(pred2.shape[0] * pred2.shape[1])

    # One lane-dense slab for all four used zeta groups.
    slab, groups = _pack_gate_groups(
        (zeta_attn_enc, zeta_mlp_enc, zeta_attn_dec, zeta_mlp_dec))

    # Weights live in SMEM (runtime values -> no recompile when they anneal).
    weights = jnp.stack([jnp.asarray(w, jnp.float32)
                         for w in (w1_enc, w2_enc, w1_dec, w2_dec)])

    kernel = functools.partial(_search_loss_kernel, groups=groups, n_base=n_base)

    pt_elems = int(pt.size)
    slab_elems = int(slab.size)
    cost = pl.CostEstimate(
        flops=3 * (pt_elems // 2) + 2 * slab_elems + 64,
        transcendentals=slab_elems,
        bytes_accessed=pt_elems * 4 + slab_elems * 4 + 16 + _LANES * 4)

    packed = pl.pallas_call(
        kernel,
        out_shape=jax.ShapeDtypeStruct((1, _LANES), jnp.float32),
        in_specs=[
            pl.BlockSpec(memory_space=pltpu.MemorySpace.SMEM),   # weights
            pl.BlockSpec(memory_space=pltpu.MemorySpace.VMEM),   # pred/target
            pl.BlockSpec(memory_space=pltpu.MemorySpace.VMEM),   # zeta slab
        ],
        out_specs=pl.BlockSpec(memory_space=pltpu.MemorySpace.VMEM),
        cost_estimate=cost,
    )(weights, pt, slab)

    # Single packed array (one slice); consumers index lazily.
    return packed[0, :6]


def _reference(pred, target, gates, w1_enc, w2_enc, w1_dec, w2_dec):
    za_e, zm_e, zp_e, za_d, zm_d, zp_d = gates
    base = jnp.mean((pred - target) ** 2)
    sp = lambda z: jnp.mean(jax.nn.sigmoid(z))
    sa_e, sm_e, sa_d, sm_d = sp(za_e), sp(zm_e), sp(za_d), sp(zm_d)
    total = base + w1_enc * sa_e + w2_enc * sm_e + w1_dec * sa_d + w2_dec * sm_d
    return jnp.stack([total, base, sa_e, sm_e, sa_d, sm_d])


if __name__ == "__main__":
    key = jax.random.PRNGKey(0)
    k = jax.random.split(key, 8)

    # Small shapes consistent with the module:
    B, F = 2, 32             # surrogate actor prediction / target (batch, features)
    L_ENC, L_DEC = 2, 1      # encoder / decoder layers
    H, D_MLP, P = 8, 32, 16  # attention-head / mlp / patch gate counts per layer

    pred = jax.random.normal(k[0], (B, F), jnp.float32)
    target = jax.random.normal(k[1], (B, F), jnp.float32)

    # Deterministically initialized gate logits (the transformer's zeta params).
    zeta_attn_enc = jax.random.normal(k[2], (L_ENC, H), jnp.float32)
    zeta_mlp_enc = jax.random.normal(k[3], (L_ENC, D_MLP), jnp.float32)
    zeta_patch_enc = jax.random.normal(k[4], (L_ENC, P), jnp.float32)
    zeta_attn_dec = jax.random.normal(k[5], (L_DEC, H), jnp.float32)
    zeta_mlp_dec = jax.random.normal(k[6], (L_DEC, D_MLP), jnp.float32)
    zeta_patch_dec = jax.random.normal(k[7], (L_DEC, P), jnp.float32)

    # settings.w1_enc / w2_enc / w1_dec / w2_dec
    w1_enc, w2_enc, w1_dec, w2_dec = 0.1, 0.05, 0.1, 0.05

    out = search_loss(pred, target,
                      zeta_attn_enc, zeta_mlp_enc, zeta_patch_enc,
                      zeta_attn_dec, zeta_mlp_dec, zeta_patch_dec,
                      w1_enc=w1_enc, w2_enc=w2_enc,
                      w1_dec=w1_dec, w2_dec=w2_dec)
    out = jax.block_until_ready(out)

    ref = _reference(pred, target,
                     (zeta_attn_enc, zeta_mlp_enc, zeta_patch_enc,
                      zeta_attn_dec, zeta_mlp_dec, zeta_patch_dec),
                     w1_enc, w2_enc, w1_dec, w2_dec)

    assert jnp.allclose(out, ref, rtol=1e-5, atol=1e-5), (out, ref)
    print("KERNEL_OK")
</pallas_src>

<mosaic_0001>
module attributes {stable_mosaic.version = 11 : i64} {
  func.func @_search_loss_kernel(%arg0: memref<4xf32, #tpu.memory_space<smem>>, %arg1: memref<2x2x32xf32, #tpu.memory_space<vmem>>, %arg2: memref<8x128xf32, #tpu.memory_space<vmem>>, %arg3: memref<1x128xf32, #tpu.memory_space<vmem>>) attributes {dimension_semantics = [], scalar_prefetch = 0 : i64, scratch_operands = 0 : i64, tpu.core_type = #tpu.core_type<tc>} {
    %c0 = arith.constant 0 : index
    %c0_0 = arith.constant 0 : index
    %c0_1 = arith.constant 0 : index
    %0 = vector.load %arg1[%c0, %c0_0, %c0_1] : memref<2x2x32xf32, #tpu.memory_space<vmem>>, vector<1x2x32xf32>
    %1 = vector.shape_cast %0 : vector<1x2x32xf32> to vector<2x32xf32>
    %c1 = arith.constant 1 : index
    %c0_2 = arith.constant 0 : index
    %c0_3 = arith.constant 0 : index
    %2 = vector.load %arg1[%c1, %c0_2, %c0_3] : memref<2x2x32xf32, #tpu.memory_space<vmem>>, vector<1x2x32xf32>
    %3 = vector.shape_cast %2 : vector<1x2x32xf32> to vector<2x32xf32>
    %4 = arith.subf %1, %3 : vector<2x32xf32>
    %5 = arith.mulf %4, %4 : vector<2x32xf32>
    %6 = vector.shape_cast %5 : vector<2x32xf32> to vector<1x2x32xf32>
    %cst = arith.constant dense<0.000000e+00> : vector<1xf32>
    %7 = vector.multi_reduction <add>, %6, %cst [1, 2] : vector<1x2x32xf32> to vector<1xf32>
    %8 = vector.shape_cast %7 : vector<1xf32> to vector<1x1x1xf32>
    %9 = vector.extract %8[0, 0, 0] : f32 from vector<1x1x1xf32>
    %10 = vector.broadcast %9 : f32 to vector<1x1xf32>
    %cst_4 = arith.constant 1.562500e-02 : f32
    %11 = vector.broadcast %cst_4 : f32 to vector<1x1xf32>
    %12 = arith.mulf %10, %11 : vector<1x1xf32>
    %c0_5 = arith.constant 0 : index
    %c0_6 = arith.constant 0 : index
    %13 = vector.load %arg2[%c0_5, %c0_6] : memref<8x128xf32, #tpu.memory_space<vmem>>, vector<8x128xf32>
    %14 = arith.negf %13 : vector<8x128xf32>
    %15 = math.exp %14 : vector<8x128xf32>
    %cst_7 = arith.constant 1.000000e+00 : f32
    %16 = vector.broadcast %cst_7 : f32 to vector<8x128xf32>
    %17 = arith.addf %16, %15 : vector<8x128xf32>
    %18 = arith.divf %16, %17 : vector<8x128xf32>
    %19 = vector.extract_strided_slice %18 {offsets = [0, 0], sizes = [1, 128], strides = [1, 1]} : vector<8x128xf32> to vector<1x128xf32>
    %20 = vector.shape_cast %19 : vector<1x128xf32> to vector<1x1x128xf32>
    %cst_8 = arith.constant dense<0.000000e+00> : vector<1xf32>
    %21 = vector.multi_reduction <add>, %20, %cst_8 [1, 2] : vector<1x1x128xf32> to vector<1xf32>
    %22 = vector.shape_cast %21 : vector<1xf32> to vector<1x1x1xf32>
    %23 = vector.extract %22[0, 0, 0] : f32 from vector<1x1x1xf32>
    %24 = vector.broadcast %23 : f32 to vector<1x1xf32>
    %cst_9 = arith.constant 6.250000e-02 : f32
    %25 = vector.broadcast %cst_9 : f32 to vector<1x1xf32>
    %26 = arith.mulf %24, %25 : vector<1x1xf32>
    %27 = vector.extract_strided_slice %18 {offsets = [1, 0], sizes = [1, 128], strides = [1, 1]} : vector<8x128xf32> to vector<1x128xf32>
    %28 = vector.shape_cast %27 : vector<1x128xf32> to vector<1x1x128xf32>
    %cst_10 = arith.constant dense<0.000000e+00> : vector<1xf32>
    %29 = vector.multi_reduction <add>, %28, %cst_10 [1, 2] : vector<1x1x128xf32> to vector<1xf32>
    %30 = vector.shape_cast %29 : vector<1xf32> to vector<1x1x1xf32>
    %31 = vector.extract %30[0, 0, 0] : f32 from vector<1x1x1xf32>
    %32 = vector.broadcast %31 : f32 to vector<1x1xf32>
    %cst_11 = arith.constant 1.562500e-02 : f32
    %33 = vector.broadcast %cst_11 : f32 to vector<1x1xf32>
    %34 = arith.mulf %32, %33 : vector<1x1xf32>
    %35 = vector.extract_strided_slice %18 {offsets = [2, 0], sizes = [1, 128], strides = [1, 1]} : vector<8x128xf32> to vector<1x128xf32>
    %36 = vector.shape_cast %35 : vector<1x128xf32> to vector<1x1x128xf32>
    %cst_12 = arith.constant dense<0.000000e+00> : vector<1xf32>
    %37 = vector.multi_reduction <add>, %36, %cst_12 [1, 2] : vector<1x1x128xf32> to vector<1xf32>
    %38 = vector.shape_cast %37 : vector<1xf32> to vector<1x1x1xf32>
    %39 = vector.extract %38[0, 0, 0] : f32 from vector<1x1x1xf32>
    %40 = vector.broadcast %39 : f32 to vector<1x1xf32>
    %cst_13 = arith.constant 1.250000e-01 : f32
    %41 = vector.broadcast %cst_13 : f32 to vector<1x1xf32>
    %42 = arith.mulf %40, %41 : vector<1x1xf32>
    %43 = vector.extract_strided_slice %18 {offsets = [3, 0], sizes = [1, 128], strides = [1, 1]} : vector<8x128xf32> to vector<1x128xf32>
    %44 = vector.shape_cast %43 : vector<1x128xf32> to vector<1x1x128xf32>
    %cst_14 = arith.constant dense<0.000000e+00> : vector<1xf32>
    %45 = vector.multi_reduction <add>, %44, %cst_14 [1, 2] : vector<1x1x128xf32> to vector<1xf32>
    %46 = vector.shape_cast %45 : vector<1xf32> to vector<1x1x1xf32>
    %47 = vector.extract %46[0, 0, 0] : f32 from vector<1x1x1xf32>
    %48 = vector.broadcast %47 : f32 to vector<1x1xf32>
    %cst_15 = arith.constant 3.125000e-02 : f32
    %49 = vector.broadcast %cst_15 : f32 to vector<1x1xf32>
    %50 = arith.mulf %48, %49 : vector<1x1xf32>
    %c0_16 = arith.constant 0 : index
    %51 = memref.load %arg0[%c0_16] : memref<4xf32, #tpu.memory_space<smem>>
    %c1_17 = arith.constant 1 : index
    %52 = memref.load %arg0[%c1_17] : memref<4xf32, #tpu.memory_space<smem>>
    %c2 = arith.constant 2 : index
    %53 = memref.load %arg0[%c2] : memref<4xf32, #tpu.memory_space<smem>>
    %c3 = arith.constant 3 : index
    %54 = memref.load %arg0[%c3] : memref<4xf32, #tpu.memory_space<smem>>
    %55 = vector.broadcast %51 : f32 to vector<1x1xf32>
    %56 = arith.mulf %55, %26 : vector<1x1xf32>
    %57 = arith.addf %12, %56 : vector<1x1xf32>
    %58 = vector.broadcast %52 : f32 to vector<1x1xf32>
    %59 = arith.mulf %58, %34 : vector<1x1xf32>
    %60 = arith.addf %57, %59 : vector<1x1xf32>
    %61 = vector.broadcast %53 : f32 to vector<1x1xf32>
    %62 = arith.mulf %61, %42 : vector<1x1xf32>
    %63 = arith.addf %60, %62 : vector<1x1xf32>
    %64 = vector.broadcast %54 : f32 to vector<1x1xf32>
    %65 = arith.mulf %64, %50 : vector<1x1xf32>
    %66 = arith.addf %63, %65 : vector<1x1xf32>
    %67 = tpu.iota {dimensions = array<i32: 1>} : vector<1x128xi32>
    %cst_18 = arith.constant 0.000000e+00 : f32
    %68 = vector.broadcast %cst_18 : f32 to vector<1x128xf32>
    %c0_i32 = arith.constant 0 : i32
    %69 = vector.broadcast %c0_i32 : i32 to vector<1x128xi32>
    %70 = arith.cmpi eq, %67, %69 : vector<1x128xi32>
    %71 = vector.shape_cast %66 : vector<1x1xf32> to vector<1x1xf32>
    %72 = vector.broadcast %71 : vector<1x1xf32> to vector<1x128xf32>
    %73 = arith.select %70, %72, %68 : vector<1x128xi1>, vector<1x128xf32>
    %c1_i32 = arith.constant 1 : i32
    %74 = vector.broadcast %c1_i32 : i32 to vector<1x128xi32>
    %75 = arith.cmpi eq, %67, %74 : vector<1x128xi32>
    %76 = vector.shape_cast %12 : vector<1x1xf32> to vector<1x1xf32>
    %77 = vector.broadcast %76 : vector<1x1xf32> to vector<1x128xf32>
    %78 = arith.select %75, %77, %73 : vector<1x128xi1>, vector<1x128xf32>
    %c2_i32 = arith.constant 2 : i32
    %79 = vector.broadcast %c2_i32 : i32 to vector<1x128xi32>
    %80 = arith.cmpi eq, %67, %79 : vector<1x128xi32>
    %81 = vector.shape_cast %26 : vector<1x1xf32> to vector<1x1xf32>
    %82 = vector.broadcast %81 : vector<1x1xf32> to vector<1x128xf32>
    %83 = arith.select %80, %82, %78 : vector<1x128xi1>, vector<1x128xf32>
    %c3_i32 = arith.constant 3 : i32
    %84 = vector.broadcast %c3_i32 : i32 to vector<1x128xi32>
    %85 = arith.cmpi eq, %67, %84 : vector<1x128xi32>
    %86 = vector.shape_cast %34 : vector<1x1xf32> to vector<1x1xf32>
    %87 = vector.broadcast %86 : vector<1x1xf32> to vector<1x128xf32>
    %88 = arith.select %85, %87, %83 : vector<1x128xi1>, vector<1x128xf32>
    %c4_i32 = arith.constant 4 : i32
    %89 = vector.broadcast %c4_i32 : i32 to vector<1x128xi32>
    %90 = arith.cmpi eq, %67, %89 : vector<1x128xi32>
    %91 = vector.shape_cast %42 : vector<1x1xf32> to vector<1x1xf32>
    %92 = vector.broadcast %91 : vector<1x1xf32> to vector<1x128xf32>
    %93 = arith.select %90, %92, %88 : vector<1x128xi1>, vector<1x128xf32>
    %c5_i32 = arith.constant 5 : i32
    %94 = vector.broadcast %c5_i32 : i32 to vector<1x128xi32>
    %95 = arith.cmpi eq, %67, %94 : vector<1x128xi32>
    %96 = vector.shape_cast %50 : vector<1x1xf32> to vector<1x1xf32>
    %97 = vector.broadcast %96 : vector<1x1xf32> to vector<1x128xf32>
    %98 = arith.select %95, %97, %93 : vector<1x128xi1>, vector<1x128xf32>
    %c0_19 = arith.constant 0 : index
    %c0_20 = arith.constant 0 : index
    %99 = vector.load %arg3[%c0_19, %c0_20] : memref<1x128xf32, #tpu.memory_space<vmem>>, vector<1x128xf32>
    tpu.vector_store %arg3[%c0_19, %c0_20], %98 {strides = array<i32>} : memref<1x128xf32, #tpu.memory_space<vmem>>, vector<1x128xf32>,
    return
  }
}

</mosaic_0001>

<llo_original>
// kernel: tpu_custom_call.1
$region0: #{tpu_custom_call.1}
  #allocation0 [shape = 'u32[]', space=smem, size = 0x4, offset = 0x4, fixed_abs, tag = 'smem constant byte address 0x4 - core index']
  #allocation1 [shape = 'u32[144,128]{1,0:T(1,128)}', space=vmem, size = 0x12000, scoped, tag = 'internal scratch']
  %s0 = inlined_call_operand.hbm [shape: f32[4], index: 0, kind: input, shape index: {}]
  %s1 = inlined_call_operand.hbm [shape: f32[2,2,32], index: 1, kind: input, shape index: {}]
  %s2 = inlined_call_operand.hbm [shape: f32[8,128], index: 2, kind: input, shape index: {}]
  %s3 = inlined_call_operand.hbm [shape: f32[1,128], index: 3, kind: output, shape index: {}]
  %s4 = sld [smem:[#allocation0]]
  $region34: #{tpu_custom_call.1} parent=0
    _
  %s6 = ssub.s32 1, %s4
  %s7 = scalar_select 0, %s6, %s4
  $region1: #{tpu_custom_call.1} parent=0
    #allocation2 [shape = 'u8[512]{0}', space=smem, size = 0x200, scoped, tag = 'input window, operand 0, single buffered']
    #allocation3 [shape = 's32[1]{0}', space=sflag, size = 0x4, scoped, tag = 'scoped memory for tpu_custom_call.1']
    #allocation4 [shape = 's32[1]{0}', space=sflag, size = 0x4, scoped, tag = 'scoped memory for tpu_custom_call.1']
    #allocation5 [shape = 's32[1]{0}', space=sflag, size = 0x4, scoped, tag = 'scoped memory for tpu_custom_call.1']
    #allocation6 [shape = 'u8[2048]{0}', space=vmem, size = 0x800, scoped, tag = 'input window, operand 1, single buffered']
    #allocation7 [shape = 'u8[4096]{0}', space=vmem, size = 0x1000, scoped, tag = 'input window, operand 2, single buffered']
    #allocation8 [shape = 's32[1]{0}', space=sflag, size = 0x4, scoped, tag = 'scoped memory for tpu_custom_call.1']
    #allocation9 [shape = 'u8[512]{0}', space=vmem, size = 0x400, scoped, tag = 'output window, operand 0, single buffered']
    %8 = vsyncpa [#allocation5], 0
    %9 = vsyncpa [#allocation3], 0
    %10 = vsyncpa [#allocation8], 0
    %11 = vsyncpa [#allocation4], 0
    // Predicated region
    $region2: #{tpu_custom_call.1} parent=1 // pred_check
      _
    $region3: #{tpu_custom_call.1} parent=1 // pred_check_branch
      %13 = sbr.rel (0) target = $region5
    $region4: #{tpu_custom_call.1} parent=1 // pred_region
      %s15 = ssub.s32 16, 16
      %16 = vsyncadd [#allocation5], %s15
      %19 = dma.hbm_to_smem %s0, 16, [#allocation2], [#allocation5]
    $region5: #{tpu_custom_call.1} parent=1 // pred_fallthru
      _
    // Predicated region
    $region6: #{tpu_custom_call.1} parent=1 // pred_check
      _
    $region7: #{tpu_custom_call.1} parent=1 // pred_check_branch
      %21 = sbr.rel (0) target = $region9
    $region8: #{tpu_custom_call.1} parent=1 // pred_region
      %s23 = ssub.s32 64, 64
      %24 = vsyncadd [#allocation3], %s23
      %s25 = sshll.u32 [#allocation6], 4
      %s26 = int_to_ptr.vmem [resolvable:$true] %s25
      %31 = dma.hbm_to_vmem [thread:$0]  %s1, 64, %s26, [#allocation3], 32, 32, 2
    $region9: #{tpu_custom_call.1} parent=1 // pred_fallthru
      _
    // Predicated region
    $region10: #{tpu_custom_call.1} parent=1 // pred_check
      _
    $region11: #{tpu_custom_call.1} parent=1 // pred_check_branch
      %33 = sbr.rel (0) target = $region13
    $region12: #{tpu_custom_call.1} parent=1 // pred_region
      %s35 = ssub.s32 128, 128
      %36 = vsyncadd [#allocation8], %s35
      %s38 = sshll.u32 [#allocation7], 4
      %s39 = int_to_ptr.vmem [resolvable:$true] %s38
      %41 = dma.hbm_to_vmem [thread:$0]  %s2, 128, %s39, [#allocation8]
    $region13: #{tpu_custom_call.1} parent=1 // pred_fallthru
      _
    // Predicated region
    $region14: #{tpu_custom_call.1} parent=1 // pred_check
      _
    $region15: #{tpu_custom_call.1} parent=1 // pred_check_branch
      %43 = sbr.rel (0) target = $region17
    $region16: #{tpu_custom_call.1} parent=1 // pred_region
      %44 = dma.done [#allocation5], 16
    $region17: #{tpu_custom_call.1} parent=1 // pred_fallthru
      _
    // Predicated region
    $region18: #{tpu_custom_call.1} parent=1 // pred_check
      _
    $region19: #{tpu_custom_call.1} parent=1 // pred_check_branch
      %46 = sbr.rel (0) target = $region21
    $region20: #{tpu_custom_call.1} parent=1 // pred_region
      %47 = dma.done [#allocation3], 64
    $region21: #{tpu_custom_call.1} parent=1 // pred_fallthru
      _
    // Predicated region
    $region22: #{tpu_custom_call.1} parent=1 // pred_check
      _
    $region23: #{tpu_custom_call.1} parent=1 // pred_check_branch
      %49 = sbr.rel (0) target = $region25
    $region24: #{tpu_custom_call.1} parent=1 // pred_region
      %50 = dma.done [#allocation8], 128
    $region25: #{tpu_custom_call.1} parent=1 // pred_fallthru
      _
    %51 = sfence
    %v52 = vld [vmem:[#allocation6] sm:$0x3]
    %s53 = scalar_lea.vmem [#allocation6], 2
    %v54 = vld [vmem:[%s53] sm:$0x3]
    %v55 = vsub.f32 %v52, %v54
    %v56 = vmul.f32 %v55, %v55
    %vm57 = vcmask 254976
    %v58 = vsel %vm57, %v56, 0.0
    %59 = vadd.xlane.f32.xlu0 %v58
    %v60 = vpop.xlane.xlu0 %59
    %v61 = vrot.slane %v60, 4
    %v62 = vadd.f32 %v60, %v61
    %v63 = vrot.slane %v62, 2
    %v64 = vadd.f32 %v62, %v63
    %v65 = vrot.slane %v64, 1
    %v66 = vadd.f32 %v64, %v65
    %s67 = vtos %v66
    %v68 = vstv %s67
    %v69 = vmul.f32 %v68, 0.015625
    %v70 = vld [vmem:[#allocation7] sm:$0xff]
    %v71 = vxor.u32 %v70, 2147483648
    %v72 = vmul.f32 %v71, 1.442695
    %v73 = vpow.pop %v72
    %v74 = vadd.f32 %v73, 1.0
    %v75 = vrcp.pop %v74
    %v76 = vmul.f32 1.0, %v75
    %vm77 = vcmask 1040384
    %v78 = vsel %vm77, %v76, 0.0
    %79 = vadd.xlane.f32.xlu0 %v78
    %v80 = vpop.xlane.xlu0 %79
    %v81 = vrot.slane %v80, 4
    %v82 = vadd.f32 %v80, %v81
    %v83 = vrot.slane %v82, 2
    %v84 = vadd.f32 %v82, %v83
    %v85 = vrot.slane %v84, 1
    %v86 = vadd.f32 %v84, %v85
    %s87 = vtos %v86
    %v88 = vstv %s87
    %v89 = vmul.f32 %v88, 0.0625
    %v91 = vrot.slane %v76, 1
    %v93 = vsel %vm77, %v91, 0.0
    %94 = vadd.xlane.f32.xlu0 %v93
    %v95 = vpop.xlane.xlu0 %94
    %v96 = vrot.slane %v95, 4
    %v97 = vadd.f32 %v95, %v96
    %v98 = vrot.slane %v97, 2
    %v99 = vadd.f32 %v97, %v98
    %v100 = vrot.slane %v99, 1
    %v101 = vadd.f32 %v99, %v100
    %s102 = vtos %v101
    %v103 = vstv %s102
    %v104 = vmul.f32 %v103, 0.015625
    %v105 = vrot.slane %v76, 2
    %v107 = vsel %vm77, %v105, 0.0
    %108 = vadd.xlane.f32.xlu0 %v107
    %v109 = vpop.xlane.xlu0 %108
    %v110 = vrot.slane %v109, 4
    %v111 = vadd.f32 %v109, %v110
    %v112 = vrot.slane %v111, 2
    %v113 = vadd.f32 %v111, %v112
    %v114 = vrot.slane %v113, 1
    %v115 = vadd.f32 %v113, %v114
    %s116 = vtos %v115
    %v117 = vstv %s116
    %v118 = vmul.f32 %v117, 0.125
    %v119 = vrot.slane %v76, 3
    %v121 = vsel %vm77, %v119, 0.0
    %122 = vadd.xlane.f32.xlu0 %v121
    %v123 = vpop.xlane.xlu0 %122
    %v124 = vrot.slane %v123, 4
    %v125 = vadd.f32 %v123, %v124
    %v126 = vrot.slane %v125, 2
    %v127 = vadd.f32 %v125, %v126
    %v128 = vrot.slane %v127, 1
    %v129 = vadd.f32 %v127, %v128
    %s130 = vtos %v129
    %v131 = vstv %s130
    %v132 = vmul.f32 %v131, 0.03125
    %s133 = sld [smem:[#allocation2]]
    %s134 = sld [smem:[#allocation2 + $0x1]]
    %s135 = sld [smem:[#allocation2 + $0x2]]
    %s136 = sld [smem:[#allocation2 + $0x3]]
    %v137 = vstv %s133
    %v138 = vmul.f32 %v137, %v89
    %v139 = vadd.f32 %v69, %v138
    %v140 = vstv %s134
    %v141 = vmul.f32 %v140, %v104
    %v142 = vadd.f32 %v139, %v141
    %v143 = vstv %s135
    %v144 = vmul.f32 %v143, %v118
    %v145 = vadd.f32 %v142, %v144
    %v146 = vstv %s136
    %v147 = vmul.f32 %v146, %v132
    %v148 = vadd.f32 %v145, %v147
    %v149 = vlaneseq
    %v150 = vand.u32 %v149, 127
    %vm151 = vcmp.eq.s32.totalorder %v150, 0
    %v152 = vsel %vm151, %v148, 0.0
    %vm153 = vcmp.eq.s32.totalorder %v150, 1
    %v154 = vsel %vm153, %v69, %v152
    %vm155 = vcmp.eq.s32.totalorder %v150, 2
    %v156 = vsel %vm155, %v89, %v154
    %vm157 = vcmp.eq.s32.totalorder %v150, 3
    %v158 = vsel %vm157, %v104, %v156
    %vm159 = vcmp.eq.s32.totalorder %v150, 4
    %v160 = vsel %vm159, %v118, %v158
    %vm161 = vcmp.eq.s32.totalorder %v150, 5
    %v162 = vsel %vm161, %v132, %v160
    %163 = vst [vmem:[#allocation9] sm:$0x1] %v162
    // Predicated region
    $region26: #{tpu_custom_call.1} parent=1 // pred_check
      _
    $region27: #{tpu_custom_call.1} parent=1 // pred_check_branch
      %165 = sbr.rel (0) target = $region29
    $region28: #{tpu_custom_call.1} parent=1 // pred_region
      %s167 = ssub.s32 16, 16
      %168 = vsyncadd [#allocation4], %s167
      %s170 = sshll.u32 [#allocation9], 4
      %s171 = int_to_ptr.vmem [resolvable:$true] %s170
      %173 = dma.vmem_to_hbm [thread:$0]  %s171, 16, %s3, [#allocation4]
    $region29: #{tpu_custom_call.1} parent=1 // pred_fallthru
      _
    // Predicated region
    $region30: #{tpu_custom_call.1} parent=1 // pred_check
      _
    $region31: #{tpu_custom_call.1} parent=1 // pred_check_branch
      %175 = sbr.rel (0) target = $region33
    $region32: #{tpu_custom_call.1} parent=1 // pred_region
      %176 = dma.done [#allocation4], 16
    $region33: #{tpu_custom_call.1} parent=1 // pred_fallthru
      _
    %177 = vsyncpa [#allocation3], 1
    %178 = vsyncpa [#allocation8], 1
    %179 = vsyncpa [#allocation4], 1
    %180 = vsyncpa [#allocation5], 1

</llo_original>
